<compile_context>
chip_gen: v5e
topology: v5e:2x2
jax: 0.10.0
libtpu: 0.0.40
codegen_flags: <defaults>
</compile_context>

<pallas_src>
import math
from functools import partial

import jax
import jax.numpy as jnp
from jax import lax
from jax.experimental import pallas as pl
from jax.experimental.pallas import tpu as pltpu

ACT_DTYPE = jnp.bfloat16          # MXU operand / activation dtype
_VMEM_LIMIT = 48 * 1024 * 1024    # scoped VMEM budget; well under v7x's 64 MiB


def _pick_tile(dim, pref):
    """Largest friendly tile <= pref that divides dim; else the whole dim (legal block)."""
    if dim <= pref:
        return dim
    for c in (pref, pref // 2, 256, 128):
        if c and dim % c == 0:
            return c
    return dim


def _gelu(y):
    # tanh-approximate GELU, computed in f32 on the accumulator.
    return 0.5 * y * (1.0 + jnp.tanh(0.7978845608028654 * (y + 0.044715 * y * y * y)))


# ----------------------------------------------------------------------------
# Tiled linear (+ optional GELU epilogue)
# ----------------------------------------------------------------------------

def _linear_kernel(x_ref, w_ref, b_ref, o_ref, acc_ref, *, act):
    k = pl.program_id(2)

    @pl.when(k == 0)
    def _():
        acc_ref[...] = jnp.zeros_like(acc_ref)

    acc_ref[...] += jnp.dot(x_ref[...], w_ref[...], preferred_element_type=jnp.float32)

    @pl.when(k == pl.num_programs(2) - 1)
    def _():
        y = acc_ref[...] + b_ref[...].astype(jnp.float32)
        if act == "gelu":
            y = _gelu(y)
        o_ref[...] = y.astype(o_ref.dtype)


def linear(x, w, b, act="none", tm=256, tn=256, tk=512):
    """x:(M,K) @ w:(K,N) + b, tiled & pipelined, f32 accumulator, optional GELU."""
    M, K = x.shape
    N = w.shape[1]
    tm, tn, tk = _pick_tile(M, tm), _pick_tile(N, tn), _pick_tile(K, tk)
    grid = (N // tn, M // tm, K // tk)   # N outer, M middle, K inner (weight reuse)
    return pl.pallas_call(
        partial(_linear_kernel, act=act),
        out_shape=jax.ShapeDtypeStruct((M, N), x.dtype),
        grid=grid,
        in_specs=[
            pl.BlockSpec((tm, tk), lambda n, m, k: (m, k)),
            pl.BlockSpec((tk, tn), lambda n, m, k: (k, n)),
            pl.BlockSpec((1, tn), lambda n, m, k: (0, n)),
        ],
        out_specs=pl.BlockSpec((tm, tn), lambda n, m, k: (m, n)),
        scratch_shapes=[pltpu.VMEM((tm, tn), jnp.float32)],
        compiler_params=pltpu.CompilerParams(
            dimension_semantics=("parallel", "parallel", "arbitrary"),
            vmem_limit_bytes=_VMEM_LIMIT,
        ),
    )(x, w, b.reshape(1, N))


# ----------------------------------------------------------------------------
# Fused Q/K/V projection: one matmul over the concatenated (D, 3D) weight
# ----------------------------------------------------------------------------

def _qkv_kernel(x_ref, w_ref, b_ref, q_ref, k_ref, v_ref, acc_ref, *, d_model):
    kk = pl.program_id(1)

    @pl.when(kk == 0)
    def _():
        acc_ref[...] = jnp.zeros_like(acc_ref)

    acc_ref[...] += jnp.dot(x_ref[...], w_ref[...], preferred_element_type=jnp.float32)

    @pl.when(kk == pl.num_programs(1) - 1)
    def _():
        y = acc_ref[...] + b_ref[...].astype(jnp.float32)
        q_ref[...] = y[:, :d_model].astype(q_ref.dtype)
        k_ref[...] = y[:, d_model:2 * d_model].astype(k_ref.dtype)
        v_ref[...] = y[:, 2 * d_model:].astype(v_ref.dtype)


def qkv_linear(x, w_qkv, b_qkv, d_model, tm=256, tk=512):
    """x:(M,D) -> (q, k, v), each (M, d_model); x read from HBM once."""
    M, K = x.shape
    N3 = w_qkv.shape[1]
    tm, tk = _pick_tile(M, tm), _pick_tile(K, tk)
    grid = (M // tm, K // tk)
    out = jax.ShapeDtypeStruct((M, d_model), x.dtype)
    return pl.pallas_call(
        partial(_qkv_kernel, d_model=d_model),
        out_shape=(out, out, out),
        grid=grid,
        in_specs=[
            pl.BlockSpec((tm, tk), lambda m, k: (m, k)),
            pl.BlockSpec((tk, N3), lambda m, k: (k, 0)),
            pl.BlockSpec((1, N3), lambda m, k: (0, 0)),
        ],
        out_specs=(
            pl.BlockSpec((tm, d_model), lambda m, k: (m, 0)),
            pl.BlockSpec((tm, d_model), lambda m, k: (m, 0)),
            pl.BlockSpec((tm, d_model), lambda m, k: (m, 0)),
        ),
        scratch_shapes=[pltpu.VMEM((tm, N3), jnp.float32)],
        compiler_params=pltpu.CompilerParams(
            dimension_semantics=("parallel", "arbitrary"),
            vmem_limit_bytes=_VMEM_LIMIT,
        ),
    )(x, w_qkv, b_qkv.reshape(1, N3))


# ----------------------------------------------------------------------------
# Matmul + bias + residual + LayerNorm fused into one kernel (LN in the epilogue)
# ----------------------------------------------------------------------------

def _linear_res_ln_kernel(x_ref, w_ref, b_ref, r_ref, g_ref, bb_ref, o_ref, acc_ref, *, eps):
    k = pl.program_id(1)

    @pl.when(k == 0)
    def _():
        acc_ref[...] = jnp.zeros_like(acc_ref)

    acc_ref[...] += jnp.dot(x_ref[...], w_ref[...], preferred_element_type=jnp.float32)

    @pl.when(k == pl.num_programs(1) - 1)
    def _():
        y = acc_ref[...] + b_ref[...].astype(jnp.float32) + r_ref[...].astype(jnp.float32)
        mu = jnp.mean(y, axis=-1, keepdims=True)
        yc = y - mu
        var = jnp.mean(yc * yc, axis=-1, keepdims=True)
        yn = yc * lax.rsqrt(var + eps)
        o_ref[...] = (yn * g_ref[...].astype(jnp.float32)
                      + bb_ref[...].astype(jnp.float32)).astype(o_ref.dtype)


def linear_residual_ln(x, w, b, residual, gamma, beta, eps=1e-5, tm=256, tk=512):
    """LayerNorm(residual + x @ w + b); LN + residual fused into the matmul finalize."""
    M, K = x.shape
    N = w.shape[1]                       # N (= d_model) kept un-tiled: LN needs full rows
    tm, tk = _pick_tile(M, tm), _pick_tile(K, tk)
    grid = (M // tm, K // tk)
    return pl.pallas_call(
        partial(_linear_res_ln_kernel, eps=eps),
        out_shape=jax.ShapeDtypeStruct((M, N), x.dtype),
        grid=grid,
        in_specs=[
            pl.BlockSpec((tm, tk), lambda m, k: (m, k)),
            pl.BlockSpec((tk, N), lambda m, k: (k, 0)),
            pl.BlockSpec((1, N), lambda m, k: (0, 0)),
            pl.BlockSpec((tm, N), lambda m, k: (m, 0)),
            pl.BlockSpec((1, N), lambda m, k: (0, 0)),
            pl.BlockSpec((1, N), lambda m, k: (0, 0)),
        ],
        out_specs=pl.BlockSpec((tm, N), lambda m, k: (m, 0)),
        scratch_shapes=[pltpu.VMEM((tm, N), jnp.float32)],
        compiler_params=pltpu.CompilerParams(
            dimension_semantics=("parallel", "arbitrary"),
            vmem_limit_bytes=_VMEM_LIMIT,
        ),
    )(x, w, b.reshape(1, N), residual, gamma.reshape(1, N), beta.reshape(1, N))


# ----------------------------------------------------------------------------
# Multi-head attention directly on the (B, T, D) layout (no head transposes)
# ----------------------------------------------------------------------------

def _heads_per_group(n_head, hd):
    """Heads handled per grid step: lane-dense (g*hd % 128 == 0) if possible,
    else all heads (block last dim == d_model, always layout-legal)."""
    for g in range(1, n_head):
        if n_head % g == 0 and (g * hd) % 128 == 0:
            return g
    return n_head


def _attn_kernel(q_ref, k_ref, v_ref, o_ref, *, scale, heads, hd):
    q = q_ref[0]                                    # (T, heads*hd) bf16
    k = k_ref[0]
    v = v_ref[0]
    outs = []
    for h in range(heads):
        sl = slice(h * hd, (h + 1) * hd)
        qs, ks, vs = q[:, sl], k[:, sl], v[:, sl]
        # QK^T by contracting on hd -> no explicit K transpose materialized.
        s = lax.dot_general(qs, ks, (((1,), (1,)), ((), ())),
                            preferred_element_type=jnp.float32) * scale    # (T, T) f32
        m = jnp.max(s, axis=-1, keepdims=True)
        p = jnp.exp(s - m)
        denom = jnp.sum(p, axis=-1, keepdims=True)
        o = jnp.dot(p.astype(vs.dtype), vs, preferred_element_type=jnp.float32)  # (T, hd)
        # Deferred softmax normalization on the small (T, hd) output (EUP reciprocal).
        outs.append(o * pl.reciprocal(denom, approx=True))
    o_ref[0] = jnp.concatenate(outs, axis=-1).astype(o_ref.dtype)


def attention(q, k, v, n_head):
    """q,k,v: (B, T, D) -> (B, T, D).  Head columns are sliced via BlockSpec;
    grid = (batch, head-group); output written back in the same (B, T, D) layout."""
    B, T, D = q.shape
    hd = D // n_head
    g = _heads_per_group(n_head, hd)
    gw = g * hd
    n_groups = n_head // g
    scale = 1.0 / math.sqrt(hd)
    spec = pl.BlockSpec((1, T, gw), lambda b, j: (b, 0, j))
    return pl.pallas_call(
        partial(_attn_kernel, scale=scale, heads=g, hd=hd),
        out_shape=jax.ShapeDtypeStruct((B, T, D), q.dtype),
        grid=(B, n_groups),
        in_specs=[spec, spec, spec],
        out_specs=spec,
        compiler_params=pltpu.CompilerParams(
            dimension_semantics=("parallel", "parallel"),
            vmem_limit_bytes=_VMEM_LIMIT,
        ),
    )(q, k, v)


# ----------------------------------------------------------------------------
# Heads
# ----------------------------------------------------------------------------

def _vocab_head_kernel(x_ref, w_ref, b_ref, o_ref):
    logits = (jnp.dot(x_ref[...], w_ref[...], preferred_element_type=jnp.float32)
              + b_ref[...].astype(jnp.float32))
    m = jnp.max(logits, axis=-1, keepdims=True)
    lse = m + jnp.log(jnp.sum(jnp.exp(logits - m), axis=-1, keepdims=True))
    o_ref[...] = (logits - lse).astype(o_ref.dtype)


def vocab_head(x, w, b, tm=256):
    """bert=True head: Linear(d_model, vocab) + LogSoftmax(dim=-1).  x:(M,D) -> (M,V) f32."""
    M, D = x.shape
    V = w.shape[1]
    tm = _pick_tile(M, tm)
    # TODO(synk): a production vocab (30k+) would need V-tiling + two-pass logsumexp.
    return pl.pallas_call(
        _vocab_head_kernel,
        out_shape=jax.ShapeDtypeStruct((M, V), jnp.float32),
        grid=(M // tm,),
        in_specs=[
            pl.BlockSpec((tm, D), lambda i: (i, 0)),
            pl.BlockSpec((D, V), lambda i: (0, 0)),
            pl.BlockSpec((1, V), lambda i: (0, 0)),
        ],
        out_specs=pl.BlockSpec((tm, V), lambda i: (i, 0)),
        compiler_params=pltpu.CompilerParams(
            dimension_semantics=("parallel",),
            vmem_limit_bytes=_VMEM_LIMIT,
        ),
    )(x, w, b.reshape(1, V))


def _mean_head_kernel(x_ref, w_ref, b_ref, o_ref):
    x = x_ref[...].astype(jnp.float32)                              # (B, S, D)
    pooled = jnp.mean(x, axis=1)                                    # (B, D)
    # (D, 1) projection as a VPU broadcast-multiply + lane reduction (MXU would be ~1/128 used).
    y = jnp.sum(pooled * w_ref[...].astype(jnp.float32), axis=-1, keepdims=True)
    o_ref[...] = (y + b_ref[...]).astype(o_ref.dtype)


def mean_pool_head(x, w, b):
    """bert=False head: Linear(d_model, 1)(x.mean(dim=1)).  x:(B,S,D) -> (B,1) f32."""
    B, S, D = x.shape
    return pl.pallas_call(
        _mean_head_kernel,
        out_shape=jax.ShapeDtypeStruct((B, 1), jnp.float32),
        in_specs=[pl.BlockSpec(memory_space=pltpu.MemorySpace.VMEM)] * 3,
        out_specs=pl.BlockSpec(memory_space=pltpu.MemorySpace.VMEM),
    )(x, w.reshape(1, D), b.reshape(1, 1))


# ----------------------------------------------------------------------------
# Model glue (plain JAX): parameter init + wiring of the Pallas kernels
# ----------------------------------------------------------------------------

def _dense(key, fan_in, fan_out, scale=0.02):
    kw, kb = jax.random.split(key)
    w = scale * jax.random.normal(kw, (fan_in, fan_out), jnp.float32)
    b = scale * jax.random.normal(kb, (fan_out,), jnp.float32)
    return w, b


def _block_params(key, d_model, d_ff):
    ks = jax.random.split(key, 4)
    wqkv, bqkv = _dense(ks[0], d_model, 3 * d_model)
    wo, bo = _dense(ks[1], d_model, d_model)
    w1, b1 = _dense(ks[2], d_model, d_ff)
    w2, b2 = _dense(ks[3], d_ff, d_model)
    return dict(
        wqkv=wqkv, bqkv=bqkv, wo=wo, bo=bo, w1=w1, b1=b1, w2=w2, b2=b2,
        ln1_g=jnp.ones((d_model,), jnp.float32), ln1_b=jnp.zeros((d_model,), jnp.float32),
        ln2_g=jnp.ones((d_model,), jnp.float32), ln2_b=jnp.zeros((d_model,), jnp.float32),
    )


def init_params(key, vocab_size, max_len, d_model, n_head, n_layers, d_ff):
    keys = jax.random.split(key, 4 + n_layers)
    params = dict(
        n_head=n_head,
        d_model=d_model,
        tok_emb=0.02 * jax.random.normal(keys[0], (vocab_size, d_model), jnp.float32),
        pos_emb=0.02 * jax.random.normal(keys[1], (max_len, d_model), jnp.float32),
        layers=[_block_params(keys[4 + i], d_model, d_ff) for i in range(n_layers)],
    )
    # Both BlockBERT heads (bert=False: Linear(D,1); bert=True: Linear(D,V)+LogSoftmax).
    params["w_head1"], params["b_head1"] = _dense(keys[2], d_model, 1)
    params["w_headV"], params["b_headV"] = _dense(keys[3], d_model, vocab_size)
    return params


def encoder_block(p, x, n_head):
    """Post-LN transformer encoder block on bf16 activations.  x: (B, T, D)."""
    B, T, D = x.shape
    x2 = x.reshape(B * T, D)

    q, k, v = qkv_linear(x2, p["wqkv"].astype(ACT_DTYPE), p["bqkv"], D)
    a = attention(q.reshape(B, T, D), k.reshape(B, T, D), v.reshape(B, T, D), n_head)

    # Output projection + residual + LayerNorm1, fused into one matmul epilogue.
    h = linear_residual_ln(a.reshape(B * T, D), p["wo"].astype(ACT_DTYPE), p["bo"],
                           x2, p["ln1_g"], p["ln1_b"])
    # FFN: GELU fused into matmul 1; residual + LayerNorm2 fused into matmul 2.
    ff = linear(h, p["w1"].astype(ACT_DTYPE), p["b1"], act="gelu")
    out = linear_residual_ln(ff, p["w2"].astype(ACT_DTYPE), p["b2"],
                             h, p["ln2_g"], p["ln2_b"])
    return out.reshape(B, T, D)


def init_state(batch_size, state_len, d_model):
    return jnp.zeros((batch_size, state_len, d_model), jnp.float32)


def block_bert_forward(params, ids, state, bert=False):
    """BlockBERT.forward(ids, state) -> (x, new_state)."""
    B, S = ids.shape
    L = state.shape[1]
    D = params["d_model"]
    n_head = params["n_head"]

    # --- BlockRecurrentTransformer (reconstructed, see module TODO) ---
    x = jnp.take(params["tok_emb"], ids, axis=0) + params["pos_emb"][:S][None, :, :]
    h = jnp.concatenate([state.astype(x.dtype), x], axis=1).astype(ACT_DTYPE)   # (B, L+S, D)
    for lp in params["layers"]:
        h = encoder_block(lp, h, n_head)
    x_out = h[:, L:]                                   # (B, S, D)
    new_state = h[:, :L].astype(jnp.float32)           # (B, L, D)

    if bert:
        logp = vocab_head(x_out.reshape(B * S, D),
                          params["w_headV"].astype(ACT_DTYPE), params["b_headV"])
        out = logp.reshape(B, S, -1)                   # softmax(linear(x)) per token
    else:
        out = mean_pool_head(x_out, params["w_head1"], params["b_head1"])   # linear(x.mean(1))
    return out, new_state


# ----------------------------------------------------------------------------
# Driver
# ----------------------------------------------------------------------------

if __name__ == "__main__":
    vocab_size = 50
    d_model = 32
    n_head = 4
    n_layers = 2
    d_ff = 4 * d_model
    B, S, state_len = 2, 8, 4

    key = jax.random.PRNGKey(0)
    pkey, ikey = jax.random.split(key)
    params = init_params(pkey, vocab_size=vocab_size, max_len=64, d_model=d_model,
                         n_head=n_head, n_layers=n_layers, d_ff=d_ff)

    ids = jax.random.randint(ikey, (B, S), 0, vocab_size, dtype=jnp.int32)
    state = init_state(B, state_len, d_model)

    # Default BlockBERT path (bert=False): Linear(d_model, 1) on the mean-pooled sequence.
    y_reg, new_state = block_bert_forward(params, ids, state, bert=False)
    # bert=True path: Linear(d_model, vocab) + LogSoftmax(dim=-1) per token.
    y_lm, _ = block_bert_forward(params, ids, state, bert=True)
    jax.block_until_ready((y_reg, y_lm, new_state))

    assert y_reg.shape == (B, 1), y_reg.shape
    assert y_lm.shape == (B, S, vocab_size), y_lm.shape
    assert new_state.shape == (B, state_len, d_model), new_state.shape
    assert bool(jnp.all(jnp.isfinite(y_reg)))
    assert bool(jnp.all(jnp.isfinite(y_lm)))
    assert bool(jnp.all(jnp.isfinite(new_state)))
    # log-softmax rows must normalize to ~1 in probability space
    assert bool(jnp.all(jnp.abs(jnp.sum(jnp.exp(y_lm), axis=-1) - 1.0) < 1e-2))
    print("KERNEL_OK")
</pallas_src>

<mosaic_0001>
module attributes {stable_mosaic.version = 11 : i64} {
  func.func @_qkv_kernel(%arg0: i32, %arg1: i32, %arg2: memref<24x32xbf16, #tpu.memory_space<vmem>>, %arg3: memref<32x96xbf16, #tpu.memory_space<vmem>>, %arg4: memref<1x96xf32, #tpu.memory_space<vmem>>, %arg5: memref<24x32xbf16, #tpu.memory_space<vmem>>, %arg6: memref<24x32xbf16, #tpu.memory_space<vmem>>, %arg7: memref<24x32xbf16, #tpu.memory_space<vmem>>, %arg8: memref<24x96xf32, #tpu.memory_space<vmem>>) attributes {dimension_semantics = [#tpu.dimension_semantics<parallel>, #tpu.dimension_semantics<arbitrary>], iteration_bounds = array<i64: 1, 1>, scalar_prefetch = 0 : i64, scratch_operands = 1 : i64, tpu.core_type = #tpu.core_type<tc>, window_params = [{transform_indices = @transform_0, window_bounds = array<i64: 24, 32>}, {transform_indices = @transform_1, window_bounds = array<i64: 32, 96>}, {pipeline_mode = #tpu.pipeline_mode<synchronous>, transform_indices = @transform_2, window_bounds = array<i64: 1, 96>}, {transform_indices = @transform_3, window_bounds = array<i64: 24, 32>}, {transform_indices = @transform_4, window_bounds = array<i64: 24, 32>}, {transform_indices = @transform_5, window_bounds = array<i64: 24, 32>}]} {
    %c0_i32 = arith.constant 0 : i32
    %0 = arith.cmpi eq, %arg1, %c0_i32 : i32
    %1 = arith.extui %0 : i1 to i32
    %c0_i32_0 = arith.constant 0 : i32
    %2 = arith.cmpi ne, %1, %c0_i32_0 : i32
    scf.if %2 {
      %cst_10 = arith.constant 0.000000e+00 : f32
      %12 = vector.broadcast %cst_10 : f32 to vector<24x96xf32>
      %c0_11 = arith.constant 0 : index
      %c0_12 = arith.constant 0 : index
      %13 = vector.load %arg8[%c0_11, %c0_12] : memref<24x96xf32, #tpu.memory_space<vmem>>, vector<24x96xf32>
      tpu.vector_store %arg8[%c0_11, %c0_12], %12 {strides = array<i32>} : memref<24x96xf32, #tpu.memory_space<vmem>>, vector<24x96xf32>,
    } else {
    }
    %c0 = arith.constant 0 : index
    %c0_1 = arith.constant 0 : index
    %3 = vector.load %arg8[%c0, %c0_1] : memref<24x96xf32, #tpu.memory_space<vmem>>, vector<24x96xf32>
    %c0_2 = arith.constant 0 : index
    %c0_3 = arith.constant 0 : index
    %4 = vector.load %arg2[%c0_2, %c0_3] : memref<24x32xbf16, #tpu.memory_space<vmem>>, vector<24x32xbf16>
    %c0_4 = arith.constant 0 : index
    %c0_5 = arith.constant 0 : index
    %5 = vector.load %arg3[%c0_4, %c0_5] : memref<32x96xbf16, #tpu.memory_space<vmem>>, vector<32x96xbf16>
    %cst = arith.constant dense<0.000000e+00> : vector<24x96xf32>
    %6 = tpu.matmul %4, %5, %cst {dimension_numbers = #tpu.dot_dimension_numbers<[1], [0], [0], [1], [0, 0, 1, 1], [], []>} : vector<24x32xbf16>, vector<32x96xbf16>, vector<24x96xf32> -> vector<24x96xf32>
    %7 = arith.addf %3, %6 : vector<24x96xf32>
    %c0_6 = arith.constant 0 : index
    %c0_7 = arith.constant 0 : index
    %8 = vector.load %arg8[%c0_6, %c0_7] : memref<24x96xf32, #tpu.memory_space<vmem>>, vector<24x96xf32>
    tpu.vector_store %arg8[%c0_6, %c0_7], %7 {strides = array<i32>} : memref<24x96xf32, #tpu.memory_space<vmem>>, vector<24x96xf32>,
    %c0_i32_8 = arith.constant 0 : i32
    %9 = arith.cmpi eq, %arg1, %c0_i32_8 : i32
    %10 = arith.extui %9 : i1 to i32
    %c0_i32_9 = arith.constant 0 : i32
    %11 = arith.cmpi ne, %10, %c0_i32_9 : i32
    scf.if %11 {
      %c0_10 = arith.constant 0 : index
      %c0_11 = arith.constant 0 : index
      %12 = vector.load %arg8[%c0_10, %c0_11] : memref<24x96xf32, #tpu.memory_space<vmem>>, vector<24x96xf32>
      %c0_12 = arith.constant 0 : index
      %c0_13 = arith.constant 0 : index
      %13 = vector.load %arg4[%c0_12, %c0_13] : memref<1x96xf32, #tpu.memory_space<vmem>>, vector<1x96xf32>
      %14 = vector.broadcast %13 : vector<1x96xf32> to vector<24x96xf32>
      %15 = arith.addf %12, %14 : vector<24x96xf32>
      %16 = vector.extract_strided_slice %15 {offsets = [0, 0], sizes = [24, 32], strides = [1, 1]} : vector<24x96xf32> to vector<24x32xf32>
      %17 = arith.truncf %16 : vector<24x32xf32> to vector<24x32xbf16>
      %c0_14 = arith.constant 0 : index
      %c0_15 = arith.constant 0 : index
      %18 = vector.load %arg5[%c0_14, %c0_15] : memref<24x32xbf16, #tpu.memory_space<vmem>>, vector<24x32xbf16>
      tpu.vector_store %arg5[%c0_14, %c0_15], %17 {strides = array<i32>} : memref<24x32xbf16, #tpu.memory_space<vmem>>, vector<24x32xbf16>,
      %19 = vector.extract_strided_slice %15 {offsets = [0, 32], sizes = [24, 32], strides = [1, 1]} : vector<24x96xf32> to vector<24x32xf32>
      %20 = arith.truncf %19 : vector<24x32xf32> to vector<24x32xbf16>
      %c0_16 = arith.constant 0 : index
      %c0_17 = arith.constant 0 : index
      %21 = vector.load %arg6[%c0_16, %c0_17] : memref<24x32xbf16, #tpu.memory_space<vmem>>, vector<24x32xbf16>
      tpu.vector_store %arg6[%c0_16, %c0_17], %20 {strides = array<i32>} : memref<24x32xbf16, #tpu.memory_space<vmem>>, vector<24x32xbf16>,
      %22 = vector.extract_strided_slice %15 {offsets = [0, 64], sizes = [24, 32], strides = [1, 1]} : vector<24x96xf32> to vector<24x32xf32>
      %23 = arith.truncf %22 : vector<24x32xf32> to vector<24x32xbf16>
      %c0_18 = arith.constant 0 : index
      %c0_19 = arith.constant 0 : index
      %24 = vector.load %arg7[%c0_18, %c0_19] : memref<24x32xbf16, #tpu.memory_space<vmem>>, vector<24x32xbf16>
      tpu.vector_store %arg7[%c0_18, %c0_19], %23 {strides = array<i32>} : memref<24x32xbf16, #tpu.memory_space<vmem>>, vector<24x32xbf16>,
    } else {
    }
    return
  }
  func.func @transform_0(%arg0: i32, %arg1: i32) -> (i32, i32) {
    %c0_i32 = arith.constant 0 : i32
    return %arg0, %arg1 : i32, i32
  }
  func.func @transform_1(%arg0: i32, %arg1: i32) -> (i32, i32) {
    %c0_i32 = arith.constant 0 : i32
    %c0_i32_0 = arith.constant 0 : i32
    return %arg1, %c0_i32 : i32, i32
  }
  func.func @transform_2(%arg0: i32, %arg1: i32) -> (i32, i32) {
    %c0_i32 = arith.constant 0 : i32
    %c0_i32_0 = arith.constant 0 : i32
    %c0_i32_1 = arith.constant 0 : i32
    return %c0_i32, %c0_i32_0 : i32, i32
  }
  func.func @transform_3(%arg0: i32, %arg1: i32) -> (i32, i32) {
    %c0_i32 = arith.constant 0 : i32
    %c0_i32_0 = arith.constant 0 : i32
    return %arg0, %c0_i32 : i32, i32
  }
  func.func @transform_4(%arg0: i32, %arg1: i32) -> (i32, i32) {
    %c0_i32 = arith.constant 0 : i32
    %c0_i32_0 = arith.constant 0 : i32
    return %arg0, %c0_i32 : i32, i32
  }
  func.func @transform_5(%arg0: i32, %arg1: i32) -> (i32, i32) {
    %c0_i32 = arith.constant 0 : i32
    %c0_i32_0 = arith.constant 0 : i32
    return %arg0, %c0_i32 : i32, i32
  }
}

</mosaic_0001>

<llo_original>
// kernel: tpu_custom_call.1
$region0: #{tpu_custom_call.1}
  #allocation0 [shape = 'u32[]', space=smem, size = 0x4, offset = 0x4, fixed_abs, tag = 'smem constant byte address 0x4 - core index']
  #allocation1 [shape = 'u32[72,128]{1,0:T(1,128)}', space=vmem, size = 0x9000, scoped, tag = 'internal scratch']
  #allocation2 [shape = 'f32[24,96]{1,0:T(8,128)}', space=vmem, size = 0x3000, scoped, tag = 'scratch operand']
  %s0 = inlined_call_operand.hbm [shape: bf16[24,32], index: 0, kind: input, shape index: {}]
  %s1 = inlined_call_operand.hbm [shape: bf16[32,96], index: 1, kind: input, shape index: {}]
  %s2 = inlined_call_operand.vmem [shape: f32[1,96], index: 2, kind: input, shape index: {}]
  %s3 = inlined_call_operand.hbm [shape: bf16[24,32], index: 3, kind: output, shape index: {0}]
  %s4 = inlined_call_operand.hbm [shape: bf16[24,32], index: 4, kind: output, shape index: {1}]
  %s5 = inlined_call_operand.hbm [shape: bf16[24,32], index: 5, kind: output, shape index: {2}]
  %6 = xla_tuple %s3, %s4, %s5
  %s7 = sld [smem:[#allocation0]]
  $region54: #{tpu_custom_call.1} parent=0
    _
  %s9 = ssub.s32 1, %s7
  %s10 = scalar_select 0, %s9, %s7
  $region1: #{tpu_custom_call.1} parent=0
    #allocation3 [shape = 'u8[6144]{0}', space=vmem, size = 0x1800, scoped, tag = 'input window, operand 0, single buffered']
    #allocation4 [shape = 's32[1]{0}', space=sflag, size = 0x4, scoped, tag = 'scoped memory for tpu_custom_call.1']
    #allocation5 [shape = 's32[1]{0}', space=sflag, size = 0x4, scoped, tag = 'scoped memory for tpu_custom_call.1']
    #allocation6 [shape = 'u8[8192]{0}', space=vmem, size = 0x2000, scoped, tag = 'input window, operand 1, single buffered']
    #allocation7 [shape = 's32[1]{0}', space=sflag, size = 0x4, scoped, tag = 'scoped memory for tpu_custom_call.1']
    #allocation8 [shape = 'u8[6144]{0}', space=vmem, size = 0x1800, scoped, tag = 'output window, operand 0, single buffered']
    #allocation9 [shape = 'u8[6144]{0}', space=vmem, size = 0x1800, scoped, tag = 'output window, operand 1, single buffered']
    #allocation10 [shape = 's32[1]{0}', space=sflag, size = 0x4, scoped, tag = 'scoped memory for tpu_custom_call.1']
    #allocation11 [shape = 'u8[6144]{0}', space=vmem, size = 0x1800, scoped, tag = 'output window, operand 2, single buffered']
    %11 = vsyncpa [#allocation4], 0
    %12 = vsyncpa [#allocation7], 0
    %13 = vsyncpa [#allocation5], 0
    %14 = vsyncpa [#allocation10], 0
    // Predicated region
    $region2: #{tpu_custom_call.1} parent=1 // pred_check
      _
    $region3: #{tpu_custom_call.1} parent=1 // pred_check_branch
      %16 = sbr.rel (0) target = $region5
    $region4: #{tpu_custom_call.1} parent=1 // pred_region
      %18 = vsyncadd [#allocation4], 0
      %s19 = sshll.u32 %s0, 4
      %s20 = int_to_ptr.hbm [resolvable:$true] %s19
      %s21 = sshll.u32 [#allocation3], 4
      %s22 = int_to_ptr.vmem [resolvable:$true] %s21
      %27 = dma.hbm_to_vmem [thread:$0]  %s20, 192, %s22, [#allocation4], 64, 64, 4
    $region5: #{tpu_custom_call.1} parent=1 // pred_fallthru
      _
    // Predicated region
    $region6: #{tpu_custom_call.1} parent=1 // pred_check
      _
    $region7: #{tpu_custom_call.1} parent=1 // pred_check_branch
      %29 = sbr.rel (0) target = $region9
    $region8: #{tpu_custom_call.1} parent=1 // pred_region
      %31 = vsyncadd [#allocation7], 0
      %s32 = sshll.u32 %s1, 4
      %s33 = int_to_ptr.hbm [resolvable:$true] %s32
      %s34 = sshll.u32 [#allocation6], 4
      %s35 = int_to_ptr.vmem [resolvable:$true] %s34
      %40 = dma.hbm_to_vmem [thread:$0]  %s33, 256, %s35, [#allocation7], 64, 64, 4
    $region9: #{tpu_custom_call.1} parent=1 // pred_fallthru
      _
    // Predicated region
    $region10: #{tpu_custom_call.1} parent=1 // pred_check
      _
    $region11: #{tpu_custom_call.1} parent=1 // pred_check_branch
      %42 = sbr.rel (0) target = $region13
    $region12: #{tpu_custom_call.1} parent=1 // pred_region
      _
    $region13: #{tpu_custom_call.1} parent=1 // pred_fallthru
      _
    // Predicated region
    $region14: #{tpu_custom_call.1} parent=1 // pred_check
      _
    $region15: #{tpu_custom_call.1} parent=1 // pred_check_branch
      %44 = sbr.rel (0) target = $region17
    $region16: #{tpu_custom_call.1} parent=1 // pred_region
      %46 = dma.done [#allocation4], 192
    $region17: #{tpu_custom_call.1} parent=1 // pred_fallthru
      _
    // Predicated region
    $region18: #{tpu_custom_call.1} parent=1 // pred_check
      _
    $region19: #{tpu_custom_call.1} parent=1 // pred_check_branch
      %48 = sbr.rel (0) target = $region21
    $region20: #{tpu_custom_call.1} parent=1 // pred_region
      %50 = dma.done [#allocation7], 256
    $region21: #{tpu_custom_call.1} parent=1 // pred_fallthru
      _
    %p52 = scmp.eq.s32.totalorder 0, 0
    // Predicated region
    $region22: #{tpu_custom_call.1} parent=1 // pred_check
      %p53 = pneg %p52
    $region23: #{tpu_custom_call.1} parent=1 // pred_check_branch
      %55 = sbr.rel (%p53) target = $region25
    $region24: #{tpu_custom_call.1} parent=1 // pred_region
      %vm56 = vcmask 785408
      %57 = vst.msk [vmem:[#allocation2] sm:$0xff] %vm56, 0.0
      %58 = vst.msk [vmem:[#allocation2 + $0x8] sm:$0xff] %vm56, 0.0
      %59 = vst.msk [vmem:[#allocation2 + $0x10] sm:$0xff] %vm56, 0.0
    $region25: #{tpu_custom_call.1} parent=1 // pred_fallthru
      _
    %v60 = vld [vmem:[#allocation2] sm:$0xff]
    %v61 = vld [vmem:[#allocation2 + $0x8] sm:$0xff]
    %v62 = vld [vmem:[#allocation2 + $0x10] sm:$0xff]
    %v63 = vld [vmem:[#allocation3] sm:$0xf]
    %v64 = vld [vmem:[#allocation3 + $0x4] sm:$0xf]
    %v65 = vld [vmem:[#allocation3 + $0x8] sm:$0xf]
    %v66 = vld [vmem:[#allocation6] sm:$0xf]
    %v67 = vld [vmem:[#allocation6 + $0x4] sm:$0xf]
    %v68 = vld [vmem:[#allocation6 + $0x8] sm:$0xf]
    %v69 = vld [vmem:[#allocation6 + $0xc] sm:$0xf]
    %v73 = vunpack.c.l.b16 %v63
    %v74 = vunpack.c.l.b16 %v64
    %v75 = vunpack.c.l.b16 %v65
    %v76 = vpack.c.b16 %v74, %v73
    %v77 = vpack.c.b16 %v75, %v75
    %v82 = vunpack.c.l.b16 %v66
    %v83 = vunpack.c.l.b16 %v67
    %v84 = vunpack.c.l.b16 %v68
    %v85 = vunpack.c.l.b16 %v69
    %v86 = vpack.c.b16 %v83, %v82
    %v87 = vpack.c.b16 %v85, %v84
    %vm90 = vcmask 261120
    %v92 = vsel %vm90, %v76, 0
    %v95 = vsel %vm90, %v77, 0
    %97 = vmatpush.bf16.msra.mxu0 0
    %98 = vmatpush.bf16.msra.mxu0 0
    %99 = vmatpush.bf16.msra.mxu0 0
    %100 = vmatpush.bf16.msra.mxu0 0
    %101 = vmatpush.bf16.msra.mxu0 0
    %102 = vmatpush.bf16.msra.mxu0 0
    %103 = vmatpush.bf16.msra.mxu0 %v87
    %104 = vmatpush.bf16.msra.mxu0 %v86
    %105 = vmatmul.bf16.gmra.mxu0 %v92
    %v106 = vpop.f32.mrf.mxu0
    %v107 = vadd.f32 0.0, %v106
    %v108 = vpop.f32.mrf.mxu0
    %v109 = vadd.f32 0.0, %v108
    %110 = vmatmul.bf16.gmra.mxu0 %v95
    %v111 = vpop.f32.mrf.mxu0
    %v112 = vadd.f32 0.0, %v111
    %v113 = vpop.f32.mrf.mxu0
    %114 = vdwg.mxu0
    %v115 = vadd.f32 %v60, %v107
    %v116 = vadd.f32 %v61, %v109
    %v117 = vadd.f32 %v62, %v112
    %vm118 = vcmask 785408
    %119 = vst.msk [vmem:[#allocation2] sm:$0xff] %vm118, %v115
    %120 = vst.msk [vmem:[#allocation2 + $0x8] sm:$0xff] %vm118, %v116
    %121 = vst.msk [vmem:[#allocation2 + $0x10] sm:$0xff] %vm118, %v117
    // Predicated region
    $region26: #{tpu_custom_call.1} parent=1 // pred_check
      %p122 = pneg %p52
    $region27: #{tpu_custom_call.1} parent=1 // pred_check_branch
      %124 = sbr.rel (%p122) target = $region29
    $region28: #{tpu_custom_call.1} parent=1 // pred_region
      %v125 = vld [vmem:[#allocation2] sm:$0xff]
      %v126 = vld [vmem:[#allocation2 + $0x8] sm:$0xff]
      %v127 = vld [vmem:[#allocation2 + $0x10] sm:$0xff]
      %v128 = vld [vmem:[%s2] sm:$0x1]
      %v130 = vperm.slane %v128, 0
      %v132 = vadd.f32 %v125, %v130
      %v133 = vadd.f32 %v126, %v130
      %v134 = vadd.f32 %v127, %v130
      %v135 = vpack.c.bf16 %v132, %v132
      %v136 = vpack.c.bf16 %v133, %v133
      %v137 = vpack.c.bf16 %v134, %v134
      %vm138 = vcmask 257024
      %139 = vst.msk [vmem:[#allocation8] sm:$0xf] %vm138, %v135
      %140 = vst.msk [vmem:[#allocation8 + $0x4] sm:$0xf] %vm138, %v136
      %141 = vst.msk [vmem:[#allocation8 + $0x8] sm:$0xf] %vm138, %v137
      %145 = vrot.lane.b32.xlu0 %v135, 96
      %v146 = vpop.permute.xlu0 %145
      %147 = vrot.lane.b32.xlu0 %v136, 96
      %v148 = vpop.permute.xlu0 %147
      %149 = vrot.lane.b32.xlu0 %v137, 96
      %v150 = vpop.permute.xlu0 %149
      %154 = vst.msk [vmem:[#allocation9] sm:$0xf] %vm138, %v146
      %155 = vst.msk [vmem:[#allocation9 + $0x4] sm:$0xf] %vm138, %v148
      %156 = vst.msk [vmem:[#allocation9 + $0x8] sm:$0xf] %vm138, %v150
      %157 = vrot.lane.b32.xlu0 %v135, 64
      %v158 = vpop.permute.xlu0 %157
      %159 = vrot.lane.b32.xlu0 %v136, 64
      %v160 = vpop.permute.xlu0 %159
      %161 = vrot.lane.b32.xlu0 %v137, 64
      %v162 = vpop.permute.xlu0 %161
      %166 = vst.msk [vmem:[#allocation11] sm:$0xf] %vm138, %v158
      %167 = vst.msk [vmem:[#allocation11 + $0x4] sm:$0xf] %vm138, %v160
      %168 = vst.msk [vmem:[#allocation11 + $0x8] sm:$0xf] %vm138, %v162
    $region29: #{tpu_custom_call.1} parent=1 // pred_fallthru
      _
    // Predicated region
    $region30: #{tpu_custom_call.1} parent=1 // pred_check
      _
    $region31: #{tpu_custom_call.1} parent=1 // pred_check_branch
      %170 = sbr.rel (0) target = $region33
    $region32: #{tpu_custom_call.1} parent=1 // pred_region
      %172 = vsyncadd [#allocation5], 0
      %s173 = sshll.u32 [#allocation8], 4
      %s174 = int_to_ptr.vmem [resolvable:$true] %s173
      %s175 = sshll.u32 %s3, 4
      %s176 = int_to_ptr.hbm [resolvable:$true] %s175
      %181 = dma.vmem_to_hbm [thread:$0]  %s174, 192, %s176, [#allocation5], 64, 64, 4
    $region33: #{tpu_custom_call.1} parent=1 // pred_fallthru
      _
    // Predicated region
    $region34: #{tpu_custom_call.1} parent=1 // pred_check
      _
    $region35: #{tpu_custom_call.1} parent=1 // pred_check_branch
      %183 = sbr.rel (0) target = $region37
    $region36: #{tpu_custom_call.1} parent=1 // pred_region
      %185 = vsyncadd [#allocation10], 0
      %s186 = sshll.u32 [#allocation9], 4
      %s187 = int_to_ptr.vmem [resolvable:$true] %s186
      %s188 = sshll.u32 %s4, 4
      %s189 = int_to_ptr.hbm [resolvable:$true] %s188
      %194 = dma.vmem_to_hbm [thread:$0]  %s187, 192, %s189, [#allocation10], 64, 64, 4
    $region37: #{tpu_custom_call.1} parent=1 // pred_fallthru
      _
    // Predicated region
    $region38: #{tpu_custom_call.1} parent=1 // pred_check
      _
    $region39: #{tpu_custom_call.1} parent=1 // pred_check_branch
      %196 = sbr.rel (0) target = $region41
    $region40: #{tpu_custom_call.1} parent=1 // pred_region
      %198 = vsyncadd [#allocation10], 0
      %s199 = sshll.u32 [#allocation11], 4
      %s200 = int_to_ptr.vmem [resolvable:$true] %s199
      %s201 = sshll.u32 %s5, 4
      %s202 = int_to_ptr.hbm [resolvable:$true] %s201
      %207 = dma.vmem_to_hbm [thread:$0]  %s200, 192, %s202, [#allocation10], 64, 64, 4
    $region41: #{tpu_custom_call.1} parent=1 // pred_fallthru
      _
    // Predicated region
    $region42: #{tpu_custom_call.1} parent=1 // pred_check
      _
    $region43: #{tpu_custom_call.1} parent=1 // pred_check_branch
      %209 = sbr.rel (0) target = $region45
    $region44: #{tpu_custom_call.1} parent=1 // pred_region
      %211 = dma.done [#allocation5], 192
    $region45: #{tpu_custom_call.1} parent=1 // pred_fallthru
      _
    // Predicated region
    $region46: #{tpu_custom_call.1} parent=1 // pred_check
      _
    $region47: #{tpu_custom_call.1} parent=1 // pred_check_branch
      %213 = sbr.rel (0) target = $region49
    $region48: #{tpu_custom_call.1} parent=1 // pred_region
      %215 = dma.done [#allocation10], 192
    $region49: #{tpu_custom_call.1} parent=1 // pred_fallthru
      _
    // Predicated region
    $region50: #{tpu_custom_call.1} parent=1 // pred_check
      _
    $region51: #{tpu_custom_call.1} parent=1 // pred_check_branch
      %217 = sbr.rel (0) target = $region53
    $region52: #{tpu_custom_call.1} parent=1 // pred_region
      %219 = dma.done [#allocation10], 192
    $region53: #{tpu_custom_call.1} parent=1 // pred_fallthru
      _
    %220 = vsyncpa [#allocation4], 1
    %221 = vsyncpa [#allocation7], 1
    %222 = vsyncpa [#allocation5], 1
    %223 = vsyncpa [#allocation10], 1

</llo_original>
